<compile_context>
chip_gen: v6e
topology: v6e:2x2x1
jax: 0.10.0
libtpu: 0.0.40
codegen_flags: <defaults>
</compile_context>

<pallas_src>
from typing import NamedTuple

import jax
import jax.numpy as jnp
from jax.experimental import pallas as pl
from jax.experimental.pallas import tpu as pltpu


def _round_up(x: int, m: int) -> int:
    return ((x + m - 1) // m) * m


# ---------------------------------------------------------------------------
# Kernels
# ---------------------------------------------------------------------------
def _qkv_kernel_full_k(x_ref, w_ref, o_ref):
    # grid = (m, s): full-K contraction -> one MXU matmul per output tile,
    # no accumulator scratch, no init/finalize branches.
    o_ref[...] = jnp.dot(
        w_ref[...], x_ref[...], preferred_element_type=jnp.float32
    )


def _qkv_kernel_split_k(x_ref, w_ref, o_ref):
    # grid = (m, s, k): the f32 output tile is resident across the K axis,
    # so accumulate straight into o_ref (no VMEM scratch copy).
    @pl.when(pl.program_id(2) == 0)
    def _init():
        o_ref[...] = jnp.zeros_like(o_ref)

    o_ref[...] += jnp.dot(
        w_ref[...], x_ref[...], preferred_element_type=jnp.float32
    )


# ---------------------------------------------------------------------------
# Parameter setup (do once; result is reused by every forward call)
# ---------------------------------------------------------------------------
class FusedQKVParams(NamedTuple):
    w_fused: jax.Array      # [m_pad, k_pad], padded + cast once
    q_dim: int
    k_dim: int
    v_dim: int
    out_dim: int
    embed_dim: int
    m_pad: int
    k_pad: int
    tm: int
    tk: int
    block_s: int
    compute_dtype: object
    full_k: bool


def prepare_qkv_params(
    w_query,
    w_key,
    w_value,
    *,
    compute_dtype=jnp.float32,
    block_m: int = 512,
    block_s: int = 512,
    max_block_k=None,
) -> FusedQKVParams:
    """Fuse + pad + cast the q/k/v projection weights ONCE."""
    q_dim, embed_dim = w_query.shape
    k_dim = w_key.shape[0]
    v_dim = w_value.shape[0]
    out_dim = q_dim + k_dim + v_dim

    itemsize = jnp.dtype(compute_dtype).itemsize
    sublane = 16 if itemsize == 2 else 8          # bf16 packs (16,128)/vreg

    if max_block_k is None:
        # Keep double-buffered W/x tiles ~<= 20 MiB (safe on v5e/v6e/v7x).
        max_block_k = 4096 if itemsize == 2 else 2048

    tm = min(_round_up(block_m, sublane), _round_up(out_dim, sublane))
    m_pad = _round_up(out_dim, tm)

    k_pad_min = _round_up(embed_dim, 128)
    full_k = k_pad_min <= max_block_k             # drop the K grid axis
    tk = k_pad_min if full_k else max_block_k
    k_pad = _round_up(embed_dim, tk)

    # Fuse the three projections and pad/cast exactly once (cached).
    w_fused = jnp.concatenate([w_query, w_key, w_value], axis=0)
    if (m_pad, k_pad) != (out_dim, embed_dim):
        w_fused = jnp.pad(
            w_fused, ((0, m_pad - out_dim), (0, k_pad - embed_dim))
        )
    w_fused = w_fused.astype(compute_dtype)

    return FusedQKVParams(
        w_fused, q_dim, k_dim, v_dim, out_dim, embed_dim,
        m_pad, k_pad, tm, tk, block_s, compute_dtype, full_k,
    )


# ---------------------------------------------------------------------------
# Forward
# ---------------------------------------------------------------------------
def qkv_projection(x, params: FusedQKVParams):
    """Fused projection: returns the [out_dim, seq_len] slab W_fused @ x."""
    embed_dim, seq_len = x.shape
    assert embed_dim == params.embed_dim, "embed_dim mismatch with params"

    ts = min(_round_up(params.block_s, 128), _round_up(seq_len, 128))
    s_pad = _round_up(seq_len, ts)

    x_p = x
    if (params.k_pad, s_pad) != (embed_dim, seq_len):
        x_p = jnp.pad(
            x, ((0, params.k_pad - embed_dim), (0, s_pad - seq_len))
        )
    if x_p.dtype != jnp.dtype(params.compute_dtype):
        x_p = x_p.astype(params.compute_dtype)

    tm, tk = params.tm, params.tk
    m_pad, k_pad = params.m_pad, params.k_pad
    itemsize = jnp.dtype(params.compute_dtype).itemsize

    # Raise the scoped-VMEM limit to cover the double-buffered tiles
    # (default scoped limit is well below physical on v5e/v6e/v7x).
    vmem_needed = 2 * (tm * tk + tk * ts) * itemsize + 2 * tm * ts * 4
    vmem_limit = int(min(max(2 * vmem_needed + (4 << 20), 32 << 20), 64 << 20))

    if params.full_k:
        grid = (m_pad // tm, s_pad // ts)
        in_specs = [
            pl.BlockSpec((tk, ts), lambda m, s: (0, s)),   # x tile (full K)
            pl.BlockSpec((tm, tk), lambda m, s: (m, 0)),   # W tile (full K)
        ]
        out_specs = pl.BlockSpec((tm, ts), lambda m, s: (m, s))
        kernel = _qkv_kernel_full_k
        dim_sem = ("parallel", "parallel")
    else:
        grid = (m_pad // tm, s_pad // ts, k_pad // tk)
        in_specs = [
            pl.BlockSpec((tk, ts), lambda m, s, k: (k, s)),
            pl.BlockSpec((tm, tk), lambda m, s, k: (m, k)),
        ]
        out_specs = pl.BlockSpec((tm, ts), lambda m, s, k: (m, s))
        kernel = _qkv_kernel_split_k
        dim_sem = ("parallel", "parallel", "arbitrary")

    out = pl.pallas_call(
        kernel,
        out_shape=jax.ShapeDtypeStruct((m_pad, s_pad), jnp.float32),
        grid_spec=pltpu.PrefetchScalarGridSpec(
            num_scalar_prefetch=0,
            grid=grid,
            in_specs=in_specs,
            out_specs=out_specs,
        ),
        compiler_params=pltpu.CompilerParams(
            dimension_semantics=dim_sem,
            vmem_limit_bytes=vmem_limit,
        ),
    )(x_p, params.w_fused)

    if (m_pad, s_pad) != (params.out_dim, seq_len):
        out = out[: params.out_dim, :seq_len]
    return out


def multi_head_attention_forward(x, params: FusedQKVParams):
    """Returns (query, key, value).

    Downstream code that can consume the fused [q+k+v, seq] slab directly
    should call qkv_projection() and avoid the row splits entirely.
    """
    out = qkv_projection(x, params)
    q_dim, k_dim = params.q_dim, params.k_dim
    query = out[:q_dim]
    key = out[q_dim:q_dim + k_dim]
    value = out[q_dim + k_dim: params.out_dim]
    return query, key, value


# ---------------------------------------------------------------------------
# Self-test
# ---------------------------------------------------------------------------
if __name__ == "__main__":
    # Small, forward-consistent shapes (module __init__ args).
    embed_dim, q_dim, k_dim, v_dim, seq_len = 32, 16, 16, 16, 8

    root = jax.random.PRNGKey(0)
    kx, kq, kk, kv = jax.random.split(root, 4)

    # Deterministic "torch.randn"-style init (standard normal).
    x = jax.random.normal(kx, (embed_dim, seq_len), dtype=jnp.float32)
    w_query = jax.random.normal(kq, (q_dim, embed_dim), dtype=jnp.float32)
    w_key = jax.random.normal(kk, (k_dim, embed_dim), dtype=jnp.float32)
    w_value = jax.random.normal(kv, (v_dim, embed_dim), dtype=jnp.float32)

    # Parameter setup: fuse + pad (+cast) the weights ONCE, reuse per call.
    params_f32 = prepare_qkv_params(w_query, w_key, w_value)
    query, key_out, value_out = multi_head_attention_forward(x, params_f32)
    jax.block_until_ready((query, key_out, value_out))

    # Cross-check against plain JAX reference (f32 compute path).
    ref_q = w_query @ x
    ref_k = w_key @ x
    ref_v = w_value @ x
    assert jnp.allclose(query, ref_q, atol=1e-4, rtol=1e-4)
    assert jnp.allclose(key_out, ref_k, atol=1e-4, rtol=1e-4)
    assert jnp.allclose(value_out, ref_v, atol=1e-4, rtol=1e-4)

    # bf16 compute path (recommended default on v5e/v6e/v7x) — sanity check.
    params_bf16 = prepare_qkv_params(
        w_query, w_key, w_value, compute_dtype=jnp.bfloat16
    )
    q_bf, k_bf, v_bf = multi_head_attention_forward(x, params_bf16)
    jax.block_until_ready((q_bf, k_bf, v_bf))
    assert jnp.allclose(q_bf, ref_q, atol=5e-1, rtol=5e-2)
    assert jnp.allclose(k_bf, ref_k, atol=5e-1, rtol=5e-2)
    assert jnp.allclose(v_bf, ref_v, atol=5e-1, rtol=5e-2)

    print("KERNEL_OK")
</pallas_src>

<mosaic_0001>
module attributes {stable_mosaic.version = 11 : i64} {
  func.func @_qkv_kernel_full_k(%arg0: i32, %arg1: i32, %arg2: memref<128x128xf32, #tpu.memory_space<vmem>>, %arg3: memref<48x128xf32, #tpu.memory_space<vmem>>, %arg4: memref<48x128xf32, #tpu.memory_space<vmem>>) attributes {dimension_semantics = [#tpu.dimension_semantics<parallel>, #tpu.dimension_semantics<parallel>], iteration_bounds = array<i64: 1, 1>, scalar_prefetch = 0 : i64, scratch_operands = 0 : i64, tpu.core_type = #tpu.core_type<tc>, window_params = [{transform_indices = @transform_0, window_bounds = array<i64: 128, 128>}, {transform_indices = @transform_1, window_bounds = array<i64: 48, 128>}, {transform_indices = @transform_2, window_bounds = array<i64: 48, 128>}]} {
    %c0 = arith.constant 0 : index
    %c0_0 = arith.constant 0 : index
    %0 = vector.load %arg3[%c0, %c0_0] : memref<48x128xf32, #tpu.memory_space<vmem>>, vector<48x128xf32>
    %c0_1 = arith.constant 0 : index
    %c0_2 = arith.constant 0 : index
    %1 = vector.load %arg2[%c0_1, %c0_2] : memref<128x128xf32, #tpu.memory_space<vmem>>, vector<128x128xf32>
    %cst = arith.constant dense<0.000000e+00> : vector<48x128xf32>
    %2 = tpu.matmul %0, %1, %cst {dimension_numbers = #tpu.dot_dimension_numbers<[1], [0], [0], [1], [0, 0, 1, 1], [], []>} : vector<48x128xf32>, vector<128x128xf32>, vector<48x128xf32> -> vector<48x128xf32>
    %c0_3 = arith.constant 0 : index
    %c0_4 = arith.constant 0 : index
    %3 = vector.load %arg4[%c0_3, %c0_4] : memref<48x128xf32, #tpu.memory_space<vmem>>, vector<48x128xf32>
    tpu.vector_store %arg4[%c0_3, %c0_4], %2 {strides = array<i32>} : memref<48x128xf32, #tpu.memory_space<vmem>>, vector<48x128xf32>,
    return
  }
  func.func @transform_0(%arg0: i32, %arg1: i32) -> (i32, i32) {
    %c0_i32 = arith.constant 0 : i32
    %c0_i32_0 = arith.constant 0 : i32
    return %c0_i32, %arg1 : i32, i32
  }
  func.func @transform_1(%arg0: i32, %arg1: i32) -> (i32, i32) {
    %c0_i32 = arith.constant 0 : i32
    %c0_i32_0 = arith.constant 0 : i32
    return %arg0, %c0_i32 : i32, i32
  }
  func.func @transform_2(%arg0: i32, %arg1: i32) -> (i32, i32) {
    %c0_i32 = arith.constant 0 : i32
    return %arg0, %arg1 : i32, i32
  }
}

</mosaic_0001>

<llo_original>
// kernel: tpu_custom_call.1
$region0: #{tpu_custom_call.1}
  #allocation0 [shape = 'u32[]', space=smem, size = 0x4, offset = 0x4, fixed_abs, tag = 'smem constant byte address 0x4 - core index']
  #allocation1 [shape = 'u32[144,128]{1,0:T(1,128)}', space=vmem, size = 0x12000, scoped, tag = 'internal scratch']
  %s0 = inlined_call_operand.hbm [shape: f32[128,128], index: 0, kind: input, shape index: {}]
  %s1 = inlined_call_operand.hbm [shape: f32[48,128], index: 1, kind: input, shape index: {}]
  %s2 = inlined_call_operand.hbm [shape: f32[48,128], index: 2, kind: output, shape index: {}]
  %s3 = sld [smem:[#allocation0]]
  $region26: #{tpu_custom_call.1} parent=0
    _
  %s5 = ssub.s32 1, %s3
  %s6 = scalar_select 0, %s5, %s3
  $region1: #{tpu_custom_call.1} parent=0
    #allocation2 [shape = 'u8[65536]{0}', space=vmem, size = 0x10000, scoped, tag = 'input window, operand 0, single buffered']
    #allocation3 [shape = 's32[1]{0}', space=sflag, size = 0x4, scoped, tag = 'scoped memory for tpu_custom_call.1']
    #allocation4 [shape = 's32[1]{0}', space=sflag, size = 0x4, scoped, tag = 'scoped memory for tpu_custom_call.1']
    #allocation5 [shape = 'u8[24576]{0}', space=vmem, size = 0x6000, scoped, tag = 'input window, operand 1, single buffered']
    #allocation6 [shape = 's32[1]{0}', space=sflag, size = 0x4, scoped, tag = 'scoped memory for tpu_custom_call.1']
    #allocation7 [shape = 'u8[24576]{0}', space=vmem, size = 0x6000, scoped, tag = 'output window, operand 0, single buffered']
    %7 = vsyncpa [#allocation3], 0
    %8 = vsyncpa [#allocation6], 0
    %9 = vsyncpa [#allocation4], 0
    // Predicated region
    $region2: #{tpu_custom_call.1} parent=1 // pred_check
      _
    $region3: #{tpu_custom_call.1} parent=1 // pred_check_branch
      %11 = sbr.rel (0) target = $region5
    $region4: #{tpu_custom_call.1} parent=1 // pred_region
      %s13 = ssub.s32 2048, 2048
      %14 = vsyncadd [#allocation3], %s13
      %s15 = sshll.u32 [#allocation2], 4
      %s16 = int_to_ptr.vmem [resolvable:$true] %s15
      %21 = dma.hbm_to_vmem [thread:$0]  %s0, 2048, %s16, [#allocation3], 128, 128, 8
    $region5: #{tpu_custom_call.1} parent=1 // pred_fallthru
      _
    // Predicated region
    $region6: #{tpu_custom_call.1} parent=1 // pred_check
      _
    $region7: #{tpu_custom_call.1} parent=1 // pred_check_branch
      %23 = sbr.rel (0) target = $region9
    $region8: #{tpu_custom_call.1} parent=1 // pred_region
      %s25 = ssub.s32 768, 768
      %26 = vsyncadd [#allocation6], %s25
      %s27 = sshll.u32 [#allocation5], 4
      %s28 = int_to_ptr.vmem [resolvable:$true] %s27
      %33 = dma.hbm_to_vmem [thread:$0]  %s1, 768, %s28, [#allocation6], 128, 128, 8
    $region9: #{tpu_custom_call.1} parent=1 // pred_fallthru
      _
    // Predicated region
    $region10: #{tpu_custom_call.1} parent=1 // pred_check
      _
    $region11: #{tpu_custom_call.1} parent=1 // pred_check_branch
      %35 = sbr.rel (0) target = $region13
    $region12: #{tpu_custom_call.1} parent=1 // pred_region
      %36 = dma.done [#allocation3], 2048
    $region13: #{tpu_custom_call.1} parent=1 // pred_fallthru
      _
    // Predicated region
    $region14: #{tpu_custom_call.1} parent=1 // pred_check
      _
    $region15: #{tpu_custom_call.1} parent=1 // pred_check_branch
      %38 = sbr.rel (0) target = $region17
    $region16: #{tpu_custom_call.1} parent=1 // pred_region
      %39 = dma.done [#allocation6], 768
    $region17: #{tpu_custom_call.1} parent=1 // pred_fallthru
      _
    %v40 = vld [vmem:[#allocation5] sm:$0xff]
    %v41 = vld [vmem:[#allocation5 + $0x8] sm:$0xff]
    %v42 = vld [vmem:[#allocation5 + $0x10] sm:$0xff]
    %v43 = vld [vmem:[#allocation5 + $0x18] sm:$0xff]
    %v44 = vld [vmem:[#allocation5 + $0x20] sm:$0xff]
    %v45 = vld [vmem:[#allocation5 + $0x28] sm:$0xff]
    %v46 = vld [vmem:[#allocation2] sm:$0xff]
    %v47 = vld [vmem:[#allocation2 + $0x8] sm:$0xff]
    %v48 = vld [vmem:[#allocation2 + $0x10] sm:$0xff]
    %v49 = vld [vmem:[#allocation2 + $0x18] sm:$0xff]
    %v50 = vld [vmem:[#allocation2 + $0x20] sm:$0xff]
    %v51 = vld [vmem:[#allocation2 + $0x28] sm:$0xff]
    %v52 = vld [vmem:[#allocation2 + $0x30] sm:$0xff]
    %v53 = vld [vmem:[#allocation2 + $0x38] sm:$0xff]
    %v54 = vld [vmem:[#allocation2 + $0x40] sm:$0xff]
    %v55 = vld [vmem:[#allocation2 + $0x48] sm:$0xff]
    %v56 = vld [vmem:[#allocation2 + $0x50] sm:$0xff]
    %v57 = vld [vmem:[#allocation2 + $0x58] sm:$0xff]
    %v58 = vld [vmem:[#allocation2 + $0x60] sm:$0xff]
    %v59 = vld [vmem:[#allocation2 + $0x68] sm:$0xff]
    %v60 = vld [vmem:[#allocation2 + $0x70] sm:$0xff]
    %v61 = vld [vmem:[#allocation2 + $0x78] sm:$0xff]
    %62 = vmatprep.subr.mxu0 0.0
    %63 = vmatpush1.msra.mxu0 %v61
    %64 = vmatprep.subr.mxu0 0.0
    %65 = vmatpush1.msra.mxu0 %v60
    %66 = vmatprep.subr.mxu0 0.0
    %67 = vmatpush1.msra.mxu0 %v59
    %68 = vmatprep.subr.mxu0 0.0
    %69 = vmatpush1.msra.mxu0 %v58
    %70 = vmatprep.subr.mxu0 0.0
    %71 = vmatpush1.msra.mxu0 %v57
    %72 = vmatprep.subr.mxu0 0.0
    %73 = vmatpush1.msra.mxu0 %v56
    %74 = vmatprep.subr.mxu0 0.0
    %75 = vmatpush1.msra.mxu0 %v55
    %76 = vmatprep.subr.mxu0 0.0
    %77 = vmatpush1.msra.mxu0 %v54
    %78 = vmatprep.subr.mxu0 0.0
    %79 = vmatpush1.msra.mxu0 %v53
    %80 = vmatprep.subr.mxu0 0.0
    %81 = vmatpush1.msra.mxu0 %v52
    %82 = vmatprep.subr.mxu0 0.0
    %83 = vmatpush1.msra.mxu0 %v51
    %84 = vmatprep.subr.mxu0 0.0
    %85 = vmatpush1.msra.mxu0 %v50
    %86 = vmatprep.subr.mxu0 0.0
    %87 = vmatpush1.msra.mxu0 %v49
    %88 = vmatprep.subr.mxu0 0.0
    %89 = vmatpush1.msra.mxu0 %v48
    %90 = vmatprep.subr.mxu0 0.0
    %91 = vmatpush1.msra.mxu0 %v47
    %92 = vmatprep.subr.mxu0 0.0
    %93 = vmatpush1.msra.mxu0 %v46
    %94 = vmatprep.subr.mxu0 0.0
    %95 = vmatpush2.msra.mxu0 0.0
    %96 = vmatprep.subr.mxu0 0.0
    %97 = vmatpush2.msra.mxu0 0.0
    %98 = vmatprep.subr.mxu0 0.0
    %99 = vmatpush2.msra.mxu0 0.0
    %100 = vmatprep.subr.mxu0 0.0
    %101 = vmatpush2.msra.mxu0 0.0
    %102 = vmatprep.subr.mxu0 0.0
    %103 = vmatpush2.msra.mxu0 0.0
    %104 = vmatprep.subr.mxu0 0.0
    %105 = vmatpush2.msra.mxu0 0.0
    %106 = vmatprep.subr.mxu0 0.0
    %107 = vmatpush2.msra.mxu0 0.0
    %108 = vmatprep.subr.mxu0 0.0
    %109 = vmatpush2.msra.mxu0 0.0
    %110 = vmatprep.subr.mxu0 0.0
    %111 = vmatpush2.msra.mxu0 0.0
    %112 = vmatprep.subr.mxu0 0.0
    %113 = vmatpush2.msra.mxu0 0.0
    %114 = vmatprep.subr.mxu0 0.0
    %115 = vmatpush2.msra.mxu0 0.0
    %116 = vmatprep.subr.mxu0 0.0
    %117 = vmatpush2.msra.mxu0 0.0
    %118 = vmatprep.subr.mxu0 0.0
    %119 = vmatpush2.msra.mxu0 0.0
    %120 = vmatprep.subr.mxu0 0.0
    %121 = vmatpush2.msra.mxu0 0.0
    %122 = vmatprep.subr.mxu0 0.0
    %123 = vmatpush2.msra.mxu0 0.0
    %124 = vmatprep.subr.mxu0 0.0
    %125 = vmatpush2.msra.mxu0 0.0
    %126 = vmatprep.mubr.f32.mxu0 0.0
    %127 = vmatmul.mubr.f32.gmra.mxu0 %v40
    %v128 = vpop.f32.mrf.mxu0
    %v129 = vadd.f32 0.0, %v128
    %v130 = vpop.f32.mrf.mxu0
    %131 = vmatprep.mubr.f32.mxu0 0.0
    %132 = vmatmul.mubr.f32.gmra.mxu0 %v41
    %v133 = vpop.f32.mrf.mxu0
    %v134 = vadd.f32 0.0, %v133
    %v135 = vpop.f32.mrf.mxu0
    %136 = vmatprep.mubr.f32.mxu0 0.0
    %137 = vmatmul.mubr.f32.gmra.mxu0 %v42
    %v138 = vpop.f32.mrf.mxu0
    %v139 = vadd.f32 0.0, %v138
    %v140 = vpop.f32.mrf.mxu0
    %141 = vmatprep.mubr.f32.mxu0 0.0
    %142 = vmatmul.mubr.f32.gmra.mxu0 %v43
    %v143 = vpop.f32.mrf.mxu0
    %v144 = vadd.f32 0.0, %v143
    %v145 = vpop.f32.mrf.mxu0
    %146 = vmatprep.mubr.f32.mxu0 0.0
    %147 = vmatmul.mubr.f32.gmra.mxu0 %v44
    %v148 = vpop.f32.mrf.mxu0
    %v149 = vadd.f32 0.0, %v148
    %v150 = vpop.f32.mrf.mxu0
    %151 = vmatprep.mubr.f32.mxu0 0.0
    %152 = vmatmul.mubr.f32.gmra.mxu0 %v45
    %v153 = vpop.f32.mrf.mxu0
    %v154 = vadd.f32 0.0, %v153
    %v155 = vpop.f32.mrf.mxu0
    %156 = vdwg.mxu0
    %157 = vst [vmem:[#allocation7] sm:$0xff] %v129
    %158 = vst [vmem:[#allocation7 + $0x8] sm:$0xff] %v134
    %159 = vst [vmem:[#allocation7 + $0x10] sm:$0xff] %v139
    %160 = vst [vmem:[#allocation7 + $0x18] sm:$0xff] %v144
    %161 = vst [vmem:[#allocation7 + $0x20] sm:$0xff] %v149
    %162 = vst [vmem:[#allocation7 + $0x28] sm:$0xff] %v154
    // Predicated region
    $region18: #{tpu_custom_call.1} parent=1 // pred_check
      _
    $region19: #{tpu_custom_call.1} parent=1 // pred_check_branch
      %164 = sbr.rel (0) target = $region21
    $region20: #{tpu_custom_call.1} parent=1 // pred_region
      %s166 = ssub.s32 768, 768
      %167 = vsyncadd [#allocation4], %s166
      %s168 = sshll.u32 [#allocation7], 4
      %s169 = int_to_ptr.vmem [resolvable:$true] %s168
      %174 = dma.vmem_to_hbm [thread:$0]  %s169, 768, %s2, [#allocation4], 128, 128, 8
    $region21: #{tpu_custom_call.1} parent=1 // pred_fallthru
      _
    // Predicated region
    $region22: #{tpu_custom_call.1} parent=1 // pred_check
      _
    $region23: #{tpu_custom_call.1} parent=1 // pred_check_branch
      %176 = sbr.rel (0) target = $region25
    $region24: #{tpu_custom_call.1} parent=1 // pred_region
      %177 = dma.done [#allocation4], 768
    $region25: #{tpu_custom_call.1} parent=1 // pred_fallthru
      _
    %178 = vsyncpa [#allocation3], 1
    %179 = vsyncpa [#allocation6], 1
    %180 = vsyncpa [#allocation4], 1

</llo_original>
